<compile_context>
chip_gen: v7x
topology: tpu7x:2x2x1
jax: 0.10.0
libtpu: 0.0.40
codegen_flags: <defaults>
</compile_context>

<pallas_src>
import functools

import jax
import jax.numpy as jnp
from jax.experimental import pallas as pl
from jax.experimental.pallas import tpu as pltpu


def _round_up(x, m):
    return ((x + m - 1) // m) * m


def _scorer_projection_kernel(x_ref, wt_ref, params_ref, o_ref, *, eps):
    # x_ref: (tm, H)   wt_ref: (H, P)   params_ref: (3, P) = [bias; gamma; beta]
    # o_ref: (tm, P)
    # Dense: y = x @ W^T + b  (weight already transposed to (H, P) in the wrapper);
    # f32 accumulation on the MXU regardless of input dtype.
    y = jnp.dot(x_ref[...], wt_ref[...], preferred_element_type=jnp.float32)
    y = y + params_ref[0:1, :].astype(jnp.float32)

    # LayerNorm over the projected (last) dimension — centered two-pass variance,
    # reusing d = y - mean for the normalize step (matches torch.nn.LayerNorm).
    mean = jnp.mean(y, axis=-1, keepdims=True)
    d = y - mean
    var = jnp.mean(d * d, axis=-1, keepdims=True)
    out = (d * jax.lax.rsqrt(var + eps)) * params_ref[1:2, :].astype(jnp.float32) \
          + params_ref[2:3, :].astype(jnp.float32)

    o_ref[...] = out.astype(o_ref.dtype)


def prepare_scorer_projection_params(weight, bias, ln_gamma, ln_beta):
    """One-time parameter prep (do this at load time, not per call):
    W^T in the lane-dense (K=H, N=P) layout and the three per-channel vectors
    packed as a single (3, P) f32 block."""
    wt = jnp.asarray(weight).T                                   # (H, P)
    params = jnp.stack([jnp.asarray(bias), jnp.asarray(ln_gamma),
                        jnp.asarray(ln_beta)], axis=0).astype(jnp.float32)
    return wt, params


def m3_scorer_projection_prepared(hidden_states, wt, params, *, eps=1e-12,
                                  row_tile=2048, out_dtype=None):
    """hidden_states: (B, S, H); wt: (H, P) pre-transposed weight;
    params: (3, P) = [bias; gamma; beta]."""
    B, S, H = hidden_states.shape
    H_w, P = wt.shape
    assert H_w == H, "weight / hidden_states feature-size mismatch"
    out_dtype = hidden_states.dtype if out_dtype is None else out_dtype
    rows = B * S

    # --- row tiling: big tiles, but always >= 2 grid steps (>= 4 when possible) ---
    rows8 = _round_up(rows, 8)
    tile_cap4 = max(512, _round_up(pl.cdiv(rows8, 4), 8))        # aim for >= 4 steps
    tile_cap2 = _round_up(pl.cdiv(rows8, 2), 8) if rows8 >= 16 else rows8  # >= 2 steps
    row_tile = max(8, min(int(row_tile), rows8, tile_cap4, tile_cap2))
    row_tile = (row_tile // 8) * 8
    rows_padded = pl.cdiv(rows, row_tile) * row_tile

    x2d = hidden_states.reshape(rows, H)
    if rows_padded != rows:
        x2d = jnp.pad(x2d, ((0, rows_padded - rows), (0, 0)))

    x_bytes = jnp.dtype(hidden_states.dtype).itemsize
    w_bytes = jnp.dtype(wt.dtype).itemsize
    o_bytes = jnp.dtype(out_dtype).itemsize

    # VMEM budget: double-buffered x (minor dim lane-padded to 128) + output,
    # single-buffered invariant weight/params, plus headroom.
    vmem_est = (2 * row_tile * max(H, 128) * x_bytes
                + 2 * row_tile * P * max(o_bytes, 4)
                + H * max(P, 128) * w_bytes
                + 3 * 128 * 4
                + (2 << 20))
    vmem_limit = int(min(max(vmem_est, 32 << 20), 64 << 20))

    cost = pl.CostEstimate(
        flops=2 * rows * H * P + 8 * rows * P,
        transcendentals=rows,
        bytes_accessed=(rows * H * x_bytes + rows * P * o_bytes
                        + H * P * w_bytes + 3 * P * 4),
    )

    kernel = functools.partial(_scorer_projection_kernel, eps=float(eps))

    out2d = pl.pallas_call(
        kernel,
        out_shape=jax.ShapeDtypeStruct((rows_padded, P), out_dtype),
        grid_spec=pltpu.PrefetchScalarGridSpec(
            num_scalar_prefetch=0,
            grid=(rows_padded // row_tile,),
            in_specs=[
                pl.BlockSpec((row_tile, H), lambda i: (i, 0)),   # x row tile
                pl.BlockSpec((H, P), lambda i: (0, 0),           # W^T, grid-invariant,
                             pipeline_mode=pl.Buffered(1)),      # single-buffered
                pl.BlockSpec((3, P), lambda i: (0, 0),           # [bias; gamma; beta]
                             pipeline_mode=pl.Buffered(1)),
            ],
            out_specs=pl.BlockSpec((row_tile, P), lambda i: (i, 0)),
        ),
        compiler_params=pltpu.CompilerParams(
            dimension_semantics=("parallel",),
            vmem_limit_bytes=vmem_limit),
        cost_estimate=cost,
    )(x2d, wt, params)

    if rows_padded != rows:
        out2d = out2d[:rows]
    return out2d.reshape(B, S, P)


def m3_scorer_projection(hidden_states, weight, bias, ln_gamma, ln_beta, *,
                         eps=1e-12, row_tile=2048, out_dtype=None):
    """Convenience wrapper: weight is (P, H) in torch nn.Linear layout.
    For repeated calls, prefer prepare_scorer_projection_params() once +
    m3_scorer_projection_prepared()."""
    wt, params = prepare_scorer_projection_params(weight, bias, ln_gamma, ln_beta)
    return m3_scorer_projection_prepared(hidden_states, wt, params, eps=eps,
                                         row_tile=row_tile, out_dtype=out_dtype)


def _reference(hidden_states, weight, bias, gamma, beta, eps=1e-12):
    y = jnp.einsum("bsh,ph->bsp", hidden_states, weight) + bias
    mean = jnp.mean(y, axis=-1, keepdims=True)
    var = jnp.mean((y - mean) ** 2, axis=-1, keepdims=True)
    return (y - mean) / jnp.sqrt(var + eps) * gamma + beta


if __name__ == "__main__":
    # config: hidden_size=32, projected_size=128, layer_norm_eps=1e-12
    B, S, H, P = 2, 8, 32, 128
    eps = 1e-12

    key = jax.random.PRNGKey(0)
    k_x, k_w, k_b, k_g, k_beta, k_x2 = jax.random.split(key, 6)

    x = jax.random.normal(k_x, (B, S, H), dtype=jnp.float32)
    weight = jax.random.normal(k_w, (P, H), dtype=jnp.float32) * 0.05
    bias = jax.random.normal(k_b, (P,), dtype=jnp.float32) * 0.01
    gamma = 1.0 + 0.1 * jax.random.normal(k_g, (P,), dtype=jnp.float32)
    beta = 0.1 * jax.random.normal(k_beta, (P,), dtype=jnp.float32)

    # Parameter prep hoisted out of the per-call path (done once).
    wt, packed = prepare_scorer_projection_params(weight, bias, gamma, beta)
    run = jax.jit(functools.partial(m3_scorer_projection_prepared, eps=eps))

    out = jax.block_until_ready(run(x, wt, packed))
    ref = _reference(x, weight, bias, gamma, beta, eps=eps)
    assert out.shape == (B, S, P)
    assert jnp.allclose(out, ref, atol=1e-4, rtol=1e-4), "mismatch vs reference"

    # Padded-rows path (rows not a multiple of the tile).
    x_odd = jax.random.normal(k_x2, (3, 5, H), dtype=jnp.float32)
    out_odd = jax.block_until_ready(run(x_odd, wt, packed))
    ref_odd = _reference(x_odd, weight, bias, gamma, beta, eps=eps)
    assert out_odd.shape == (3, 5, P)
    assert jnp.allclose(out_odd, ref_odd, atol=1e-4, rtol=1e-4), "mismatch (padded path)"

    # bf16 activations / weight with bf16 output (the byte-saving path); params stay f32.
    x_bf = x.astype(jnp.bfloat16)
    wt_bf = wt.astype(jnp.bfloat16)
    out_bf = jax.block_until_ready(
        m3_scorer_projection_prepared(x_bf, wt_bf, packed, eps=eps,
                                      out_dtype=jnp.bfloat16))
    assert out_bf.dtype == jnp.bfloat16 and out_bf.shape == (B, S, P)
    assert jnp.allclose(out_bf.astype(jnp.float32), ref, atol=1e-1, rtol=1e-1), \
        "mismatch (bf16 path)"

    print("KERNEL_OK")
</pallas_src>

<mosaic_0001>
module attributes {stable_mosaic.version = 11 : i64} {
  func.func @_scorer_projection_kernel(%arg0: i32, %arg1: memref<8x32xf32, #tpu.memory_space<vmem>>, %arg2: memref<32x128xf32, #tpu.memory_space<vmem>>, %arg3: memref<3x128xf32, #tpu.memory_space<vmem>>, %arg4: memref<8x128xf32, #tpu.memory_space<vmem>>) attributes {dimension_semantics = [#tpu.dimension_semantics<parallel>], iteration_bounds = array<i64: 2>, scalar_prefetch = 0 : i64, scratch_operands = 0 : i64, tpu.core_type = #tpu.core_type<tc>, window_params = [{transform_indices = @transform_0, window_bounds = array<i64: 8, 32>}, {pipeline_mode = #tpu.pipeline_mode<synchronous>, transform_indices = @transform_1, window_bounds = array<i64: 32, 128>}, {pipeline_mode = #tpu.pipeline_mode<synchronous>, transform_indices = @transform_2, window_bounds = array<i64: 3, 128>}, {transform_indices = @transform_3, window_bounds = array<i64: 8, 128>}]} {
    %c0 = arith.constant 0 : index
    %c0_0 = arith.constant 0 : index
    %0 = vector.load %arg1[%c0, %c0_0] : memref<8x32xf32, #tpu.memory_space<vmem>>, vector<8x32xf32>
    %c0_1 = arith.constant 0 : index
    %c0_2 = arith.constant 0 : index
    %1 = vector.load %arg2[%c0_1, %c0_2] : memref<32x128xf32, #tpu.memory_space<vmem>>, vector<32x128xf32>
    %cst = arith.constant dense<0.000000e+00> : vector<8x128xf32>
    %2 = tpu.matmul %0, %1, %cst {dimension_numbers = #tpu.dot_dimension_numbers<[1], [0], [0], [1], [0, 0, 1, 1], [], []>} : vector<8x32xf32>, vector<32x128xf32>, vector<8x128xf32> -> vector<8x128xf32>
    %c0_3 = arith.constant 0 : index
    %c0_4 = arith.constant 0 : index
    %3 = vector.load %arg3[%c0_3, %c0_4] : memref<3x128xf32, #tpu.memory_space<vmem>>, vector<1x128xf32>
    %4 = vector.broadcast %3 : vector<1x128xf32> to vector<8x128xf32>
    %5 = arith.addf %2, %4 : vector<8x128xf32>
    %cst_5 = arith.constant dense<0.000000e+00> : vector<8xf32>
    %6 = vector.multi_reduction <add>, %5, %cst_5 [1] : vector<8x128xf32> to vector<8xf32>
    %7 = vector.shape_cast %6 : vector<8xf32> to vector<8x1xf32>
    %cst_6 = arith.constant 1.280000e+02 : f32
    %8 = vector.broadcast %cst_6 : f32 to vector<8x1xf32>
    %9 = arith.divf %7, %8 : vector<8x1xf32>
    %10 = vector.broadcast %9 : vector<8x1xf32> to vector<8x128xf32>
    %11 = arith.subf %5, %10 : vector<8x128xf32>
    %12 = arith.mulf %11, %11 : vector<8x128xf32>
    %cst_7 = arith.constant dense<0.000000e+00> : vector<8xf32>
    %13 = vector.multi_reduction <add>, %12, %cst_7 [1] : vector<8x128xf32> to vector<8xf32>
    %14 = vector.shape_cast %13 : vector<8xf32> to vector<8x1xf32>
    %cst_8 = arith.constant 1.280000e+02 : f32
    %15 = vector.broadcast %cst_8 : f32 to vector<8x1xf32>
    %16 = arith.divf %14, %15 : vector<8x1xf32>
    %cst_9 = arith.constant 9.99999996E-13 : f32
    %17 = vector.broadcast %cst_9 : f32 to vector<8x1xf32>
    %18 = arith.addf %16, %17 : vector<8x1xf32>
    %19 = math.rsqrt %18 : vector<8x1xf32>
    %20 = vector.broadcast %19 : vector<8x1xf32> to vector<8x128xf32>
    %21 = arith.mulf %11, %20 : vector<8x128xf32>
    %c1 = arith.constant 1 : index
    %c0_10 = arith.constant 0 : index
    %22 = vector.load %arg3[%c1, %c0_10] : memref<3x128xf32, #tpu.memory_space<vmem>>, vector<1x128xf32>
    %23 = vector.broadcast %22 : vector<1x128xf32> to vector<8x128xf32>
    %24 = arith.mulf %21, %23 : vector<8x128xf32>
    %c2 = arith.constant 2 : index
    %c0_11 = arith.constant 0 : index
    %25 = vector.load %arg3[%c2, %c0_11] : memref<3x128xf32, #tpu.memory_space<vmem>>, vector<1x128xf32>
    %26 = vector.broadcast %25 : vector<1x128xf32> to vector<8x128xf32>
    %27 = arith.addf %24, %26 : vector<8x128xf32>
    %c0_12 = arith.constant 0 : index
    %c0_13 = arith.constant 0 : index
    %28 = vector.load %arg4[%c0_12, %c0_13] : memref<8x128xf32, #tpu.memory_space<vmem>>, vector<8x128xf32>
    tpu.vector_store %arg4[%c0_12, %c0_13], %27 {strides = array<i32>} : memref<8x128xf32, #tpu.memory_space<vmem>>, vector<8x128xf32>,
    return
  }
  func.func @transform_0(%arg0: i32) -> (i32, i32) {
    %c0_i32 = arith.constant 0 : i32
    %c0_i32_0 = arith.constant 0 : i32
    return %arg0, %c0_i32 : i32, i32
  }
  func.func @transform_1(%arg0: i32) -> (i32, i32) {
    %c0_i32 = arith.constant 0 : i32
    %c0_i32_0 = arith.constant 0 : i32
    %c0_i32_1 = arith.constant 0 : i32
    return %c0_i32, %c0_i32_0 : i32, i32
  }
  func.func @transform_2(%arg0: i32) -> (i32, i32) {
    %c0_i32 = arith.constant 0 : i32
    %c0_i32_0 = arith.constant 0 : i32
    %c0_i32_1 = arith.constant 0 : i32
    return %c0_i32, %c0_i32_0 : i32, i32
  }
  func.func @transform_3(%arg0: i32) -> (i32, i32) {
    %c0_i32 = arith.constant 0 : i32
    %c0_i32_0 = arith.constant 0 : i32
    return %arg0, %c0_i32 : i32, i32
  }
}

</mosaic_0001>

<llo_original>
// kernel: m3_scorer_projection_prepared.1
$region0: #{m3_scorer_projection_prepared.1}
  #allocation0 [shape = 'u32[]', space=smem, size = 0x4, offset = 0x4, fixed_abs, tag = 'smem constant byte address 0x4 - core index']
  #allocation1 [shape = 'u32[144,128]{1,0:T(1,128)}', space=vmem, size = 0x12000, scoped, tag = 'internal scratch']
  %s0 = inlined_call_operand.hbm [shape: f32[16,32], index: 0, kind: input, shape index: {}]
  %s1 = inlined_call_operand.hbm [shape: f32[32,128], index: 1, kind: input, shape index: {}]
  %s2 = inlined_call_operand.vmem [shape: f32[3,128], index: 2, kind: input, shape index: {}]
  %s3 = inlined_call_operand.hbm [shape: f32[16,128], index: 3, kind: output, shape index: {}]
  %s4 = sld [smem:[#allocation0]]
  $region53: #{m3_scorer_projection_prepared.1} parent=0
    _
  %s6 = ssub.s32 1, %s4
  %s7 = scalar_select 0, %s6, %s4
  $region1: #{m3_scorer_projection_prepared.1} parent=0
    #allocation2 [shape = 'u8[8192]{0}', space=vmem, size = 0x2000, scoped, tag = 'input window, operand 0']
    #allocation3 [shape = 's32[2]{0}', space=sflag, size = 0x8, scoped, tag = 'scoped memory for m3_scorer_projection_prepared.1']
    #allocation4 [shape = 's32[2]{0}', space=sflag, size = 0x8, scoped, tag = 'scoped memory for m3_scorer_projection_prepared.1']
    #allocation5 [shape = 'u8[16384]{0}', space=vmem, size = 0x4000, scoped, tag = 'input window, operand 1, single buffered']
    #allocation6 [shape = 's32[1]{0}', space=sflag, size = 0x4, scoped, tag = 'scoped memory for m3_scorer_projection_prepared.1']
    #allocation7 [shape = 'u8[8192]{0}', space=vmem, size = 0x2000, scoped, tag = 'output window, operand 0']
    %8 = vsyncpa [#allocation3], 0
    %s9 = scalar_lea.sflag [#allocation3], 1
    %10 = vsyncpa %s9, 0
    %11 = vsyncpa [#allocation6], 0
    %12 = vsyncpa [#allocation4], 0
    %s13 = scalar_lea.sflag [#allocation4], 1
    %14 = vsyncpa %s13, 0
    loop: start=0, step=1, limit=4
    $region2: #{m3_scorer_projection_prepared.1} parent=1 // loop_pre_header
      _
    $region3: #{m3_scorer_projection_prepared.1} parent=1 // loop_header
      %s16 = sphi 0, %s20
      %p17 = scmp.ge.s32.totalorder %s16, 4
      %s26 = sphi 0, %s28
      %s29 = sphi 0, %s26
      %s30 = sphi 0, %s29
      %s46 = sphi 0, %s30
      %s50 = sphi 0, %s50
      %s52 = sphi 0, %s50
      %s53 = sphi 0, %s52
      %s67 = sphi 0, %s53
      %s71 = sphi 0, %s71
      %s73 = sphi 0, %s71
      %s74 = sphi 0, %s73
      %s88 = sphi 0, %s74
      %s94 = sphi 0, %s96
      %s97 = sphi 0, %s94
      %s98 = sphi 0, %s97
      %s114 = sphi 0, %s98
    $region4: #{m3_scorer_projection_prepared.1} parent=1 // loop_header_branch
      %19 = sbr.rel (%p17) target = $region8
    $region5: #{m3_scorer_projection_prepared.1} parent=1 // loop_body
      %s21 = ssub.s32 %s16, 1
      %s22 = ssub.s32 %s16, 2
      %s23 = sadd.s32 %s16, 1
      %s24 = ssub.s32 %s16, %s23
      %p25 = scmp.eq.s32.totalorder %s24, 0
      %s27 = sadd.s32 %s26, 1
      %s28 = scalar_select %p25, %s26, %s27
      %p31 = pneg %p25
      %p32 = scmp.eq.s32.totalorder %s16, 1
      %p33 = por %p31, %p32
      %p34 = scmp.ne.s32.totalorder %s26, %s29
      %p35 = scmp.eq.s32.totalorder %s16, 0
      %p36 = por %p34, %p35
      %p37 = scmp.ne.s32.totalorder %s26, %s29
      %p38 = scmp.eq.s32.totalorder %s21, 1
      %p39 = por %p37, %p38
      %p40 = scmp.ne.s32.totalorder %s29, %s30
      %p41 = scmp.eq.s32.totalorder %s21, 0
      %p42 = por %p40, %p41
      %p43 = scmp.ne.s32.totalorder %s29, %s30
      %p44 = scmp.eq.s32.totalorder %s22, 1
      %p45 = por %p43, %p44
      %p47 = scmp.ne.s32.totalorder %s30, %s46
      %p48 = scmp.eq.s32.totalorder %s22, 0
      %p49 = por %p47, %p48
      %s51 = sadd.s32 %s50, 1
      %p54 = scmp.eq.s32.totalorder %s16, 1
      %p55 = scmp.ne.s32.totalorder %s50, %s52
      %p56 = scmp.eq.s32.totalorder %s16, 0
      %p57 = por %p55, %p56
      %p58 = scmp.ne.s32.totalorder %s50, %s52
      %p59 = scmp.eq.s32.totalorder %s21, 1
      %p60 = por %p58, %p59
      %p61 = scmp.ne.s32.totalorder %s52, %s53
      %p62 = scmp.eq.s32.totalorder %s21, 0
      %p63 = por %p61, %p62
      %p64 = scmp.ne.s32.totalorder %s52, %s53
      %p65 = scmp.eq.s32.totalorder %s22, 1
      %p66 = por %p64, %p65
      %p68 = scmp.ne.s32.totalorder %s53, %s67
      %p69 = scmp.eq.s32.totalorder %s22, 0
      %p70 = por %p68, %p69
      %s72 = sadd.s32 %s71, 1
      %p75 = scmp.eq.s32.totalorder %s16, 1
      %p76 = scmp.ne.s32.totalorder %s71, %s73
      %p77 = scmp.eq.s32.totalorder %s16, 0
      %p78 = por %p76, %p77
      %p79 = scmp.ne.s32.totalorder %s71, %s73
      %p80 = scmp.eq.s32.totalorder %s21, 1
      %p81 = por %p79, %p80
      %p82 = scmp.ne.s32.totalorder %s73, %s74
      %p83 = scmp.eq.s32.totalorder %s21, 0
      %p84 = por %p82, %p83
      %p85 = scmp.ne.s32.totalorder %s73, %s74
      %p86 = scmp.eq.s32.totalorder %s22, 1
      %p87 = por %p85, %p86
      %p89 = scmp.ne.s32.totalorder %s74, %s88
      %p90 = scmp.eq.s32.totalorder %s22, 0
      %p91 = por %p89, %p90
      %s92 = ssub.s32 %s16, %s23
      %p93 = scmp.eq.s32.totalorder %s92, 0
      %s95 = sadd.s32 %s94, 1
      %s96 = scalar_select %p93, %s94, %s95
      %p99 = pneg %p93
      %p100 = scmp.eq.s32.totalorder %s16, 1
      %p101 = por %p99, %p100
      %p102 = scmp.ne.s32.totalorder %s94, %s97
      %p103 = scmp.eq.s32.totalorder %s16, 0
      %p104 = por %p102, %p103
      %p105 = scmp.ne.s32.totalorder %s94, %s97
      %p106 = scmp.eq.s32.totalorder %s21, 1
      %p107 = por %p105, %p106
      %p108 = scmp.ne.s32.totalorder %s97, %s98
      %p109 = scmp.eq.s32.totalorder %s21, 0
      %p110 = por %p108, %p109
      %p111 = scmp.ne.s32.totalorder %s97, %s98
      %p112 = scmp.eq.s32.totalorder %s22, 1
      %p113 = por %p111, %p112
      %p115 = scmp.ne.s32.totalorder %s98, %s114
      %p116 = scmp.eq.s32.totalorder %s22, 0
      %p117 = por %p115, %p116
      %p118 = scmp.le.s32.totalorder 1, %s16
      %p119 = scmp.lt.s32.totalorder %s16, 3
      %p120 = pnand %p118, %p119
      %p121 = pneg %p120
      // Predicated region
      $region9: #{m3_scorer_projection_prepared.1} parent=5 // pred_check
        _
      $region10: #{m3_scorer_projection_prepared.1} parent=5 // pred_check_branch
        %123 = sbr.rel (%p120) target = $region12
      $region11: #{m3_scorer_projection_prepared.1} parent=5 // pred_region
        %s124 = ssub.s32 %s16, 1
        // Predicated region
        $region13: #{m3_scorer_projection_prepared.1} parent=11 // pred_check
          %p125 = pneg %p63
        $region14: #{m3_scorer_projection_prepared.1} parent=11 // pred_check_branch
          %127 = sbr.rel (%p125) target = $region16
        $region15: #{m3_scorer_projection_prepared.1} parent=11 // pred_region
          %s129 = ssub.s32 512, 512
          %130 = vsyncadd [#allocation6], %s129
          %s131 = sshll.u32 [#allocation5], 4
          %s132 = int_to_ptr.vmem [resolvable:$true] %s131
          %137 = dma.hbm_to_vmem [thread:$0]  %s1, 512, %s132, [#allocation6], 128, 128, 8
        $region16: #{m3_scorer_projection_prepared.1} parent=11 // pred_fallthru
          _
        // Predicated region
        $region17: #{m3_scorer_projection_prepared.1} parent=11 // pred_check
          %p138 = pneg %p84
        $region18: #{m3_scorer_projection_prepared.1} parent=11 // pred_check_branch
          %140 = sbr.rel (%p138) target = $region20
        $region19: #{m3_scorer_projection_prepared.1} parent=11 // pred_region
          _
        $region20: #{m3_scorer_projection_prepared.1} parent=11 // pred_fallthru
          _
      $region12: #{m3_scorer_projection_prepared.1} parent=5 // pred_fallthru
        _
      %p141 = scmp.lt.s32.totalorder %s16, 2
      // Predicated region
      $region21: #{m3_scorer_projection_prepared.1} parent=5 // pred_check
        %p142 = pneg %p141
      $region22: #{m3_scorer_projection_prepared.1} parent=5 // pred_check_branch
        %144 = sbr.rel (%p142) target = $region24
      $region23: #{m3_scorer_projection_prepared.1} parent=5 // pred_region
        // Predicated region
        $region25: #{m3_scorer_projection_prepared.1} parent=23 // pred_check
          %p145 = pneg %p36
        $region26: #{m3_scorer_projection_prepared.1} parent=23 // pred_check_branch
          %147 = sbr.rel (%p145) target = $region28
        $region27: #{m3_scorer_projection_prepared.1} parent=23 // pred_region
          %s148 = sand.u32 %s26, 1
          %s149 = scalar_lea.sflag [#allocation3], %s148
          %s150 = sand.u32 %s26, 1
          %s151 = smul.addr %s150, 8
          %s152 = scalar_lea.vmem [#allocation2], %s151
          %s154 = ssub.s32 128, 128
          %155 = vsyncadd %s149, %s154
          %s156 = smul.addr %s16, 128
          %s157 = scalar_lea.hbm %s0, %s156
          %s159 = sshll.u32 %s152, 4
          %s160 = int_to_ptr.vmem [resolvable:$true] %s159
          %162 = dma.hbm_to_vmem [thread:$0]  %s157, 128, %s160, %s149
        $region28: #{m3_scorer_projection_prepared.1} parent=23 // pred_fallthru
          _
      $region24: #{m3_scorer_projection_prepared.1} parent=5 // pred_fallthru
        _
      %p163 = scmp.le.s32.totalorder 1, %s16
      %p164 = scmp.lt.s32.totalorder %s16, 3
      %p165 = pnand %p163, %p164
      %p166 = pneg %p165
      // Predicated region
      $region29: #{m3_scorer_projection_prepared.1} parent=5 // pred_check
        _
      $region30: #{m3_scorer_projection_prepared.1} parent=5 // pred_check_branch
        %168 = sbr.rel (%p165) target = $region32
      $region31: #{m3_scorer_projection_prepared.1} parent=5 // pred_region
        %s169 = ssub.s32 %s16, 1
        %s170 = sand.u32 %s29, 1
        %s171 = scalar_lea.sflag [#allocation3], %s170
        %s172 = sand.u32 %s29, 1
        %s173 = smul.addr %s172, 8
        %s174 = scalar_lea.vmem [#allocation2], %s173
        // Predicated region
        $region33: #{m3_scorer_projection_prepared.1} parent=31 // pred_check
          %p175 = pneg %p42
        $region34: #{m3_scorer_projection_prepared.1} parent=31 // pred_check_branch
          %177 = sbr.rel (%p175) target = $region36
        $region35: #{m3_scorer_projection_prepared.1} parent=31 // pred_region
          %178 = dma.done %s171, 128
        $region36: #{m3_scorer_projection_prepared.1} parent=31 // pred_fallthru
          _
        // Predicated region
        $region37: #{m3_scorer_projection_prepared.1} parent=31 // pred_check
          %p179 = pneg %p63
        $region38: #{m3_scorer_projection_prepared.1} parent=31 // pred_check_branch
          %181 = sbr.rel (%p179) target = $region40
        $region39: #{m3_scorer_projection_prepared.1} parent=31 // pred_region
          %182 = dma.done [#allocation6], 512
        $region40: #{m3_scorer_projection_prepared.1} parent=31 // pred_fallthru
          _
        %s183 = sand.u32 %s29, 1
        %s184 = scalar_lea.sflag [#allocation3], %s183
        %s185 = sand.u32 %s29, 1
        %s186 = smul.addr %s185, 8
        %s187 = scalar_lea.vmem [#allocation2], %s186
        %p188 = pneg %p42
        %p189 = pneg %p39
        %p190 = pneg %p63
        %p191 = pneg %p60
        %p192 = pneg %p84
        %p193 = pneg %p81
        %p194 = pneg %p110
        %p195 = pneg %p107
        %s196 = sand.u32 %s97, 1
        %s197 = scalar_lea.sflag [#allocation4], %s196
        %s198 = sand.u32 %s97, 1
        %s199 = smul.addr %s198, 8
        %s200 = scalar_lea.vmem [#allocation7], %s199
        %v201 = vld [vmem:[%s174] sm:$0xff]
        %v202 = vld [vmem:[#allocation5] sm:$0xff]
        %v203 = vld [vmem:[#allocation5 + $0x8] sm:$0xff]
        %v204 = vld [vmem:[#allocation5 + $0x10] sm:$0xff]
        %v205 = vld [vmem:[#allocation5 + $0x18] sm:$0xff]
        %v206 = vld [vmem:[%s2] sm:$0x1]
        %v207 = vlaneseq
        %v208 = vshrl.u32 %v207, 7
        %v209 = vsub.s32 0, %v208
        %v210 = vrot.slane %v206, %v209
        %vm211 = vcmask 261120
        %v213 = vsel %vm211, %v201, 0
        %215 = vmatprep.subr.mxu0 0.0
        %216 = vmatpush1.msra.mxu0 %v202
        %217 = vmatprep.subr.mxu0 0.0
        %218 = vmatpush1.msra.mxu0 %v203
        %219 = vmatprep.subr.mxu0 0.0
        %220 = vmatpush1.msra.mxu0 %v204
        %221 = vmatprep.subr.mxu0 0.0
        %222 = vmatpush1.msra.mxu0 %v205
        %223 = vmatprep.subr.mxu0 0.0
        %224 = vmatpush1.msra.mxu0 0.0
        %225 = vmatprep.subr.mxu0 0.0
        %226 = vmatpush1.msra.mxu0 0.0
        %227 = vmatprep.subr.mxu0 0.0
        %228 = vmatpush1.msra.mxu0 0.0
        %229 = vmatprep.subr.mxu0 0.0
        %230 = vmatpush1.msra.mxu0 0.0
        %231 = vmatprep.subr.mxu0 0.0
        %232 = vmatpush1.msra.mxu0 0.0
        %233 = vmatprep.subr.mxu0 0.0
        %234 = vmatpush1.msra.mxu0 0.0
        %235 = vmatprep.subr.mxu0 0.0
        %236 = vmatpush1.msra.mxu0 0.0
        %237 = vmatprep.subr.mxu0 0.0
        %238 = vmatpush1.msra.mxu0 0.0
        %239 = vmatprep.subr.mxu0 0.0
        %240 = vmatpush1.msra.mxu0 0.0
        %241 = vmatprep.subr.mxu0 0.0
        %242 = vmatpush1.msra.mxu0 0.0
        %243 = vmatprep.subr.mxu0 0.0
        %244 = vmatpush1.msra.mxu0 0.0
        %245 = vmatprep.subr.mxu0 0.0
        %246 = vmatpush1.msra.mxu0 0.0
        %247 = vmatprep.subr.mxu0 0.0
        %248 = vmatpush1.msra.mxu0 0.0
        %249 = vmatprep.subr.mxu0 0.0
        %250 = vmatpush1.msra.mxu0 0.0
        %251 = vmatprep.subr.mxu0 0.0
        %252 = vmatpush1.msra.mxu0 0.0
        %253 = vmatprep.subr.mxu0 0.0
        %254 = vmatpush1.msra.mxu0 0.0
        %255 = vmatprep.subr.mxu0 0.0
        %256 = vmatpush1.msra.mxu0 0.0
        %257 = vmatprep.subr.mxu0 0.0
        %258 = vmatpush1.msra.mxu0 0.0
        %259 = vmatprep.subr.mxu0 0.0
        %260 = vmatpush1.msra.mxu0 0.0
        %261 = vmatprep.subr.mxu0 0.0
        %262 = vmatpush1.msra.mxu0 0.0
        %263 = vmatprep.subr.mxu0 0.0
        %264 = vmatpush1.msra.mxu0 0.0
        %265 = vmatprep.subr.mxu0 0.0
        %266 = vmatpush1.msra.mxu0 0.0
        %267 = vmatprep.subr.mxu0 0.0
        %268 = vmatpush1.msra.mxu0 0.0
        %269 = vmatprep.subr.mxu0 0.0
        %270 = vmatpush1.msra.mxu0 0.0
        %271 = vmatprep.subr.mxu0 0.0
        %272 = vmatpush1.msra.mxu0 0.0
        %273 = vmatprep.subr.mxu0 0.0
        %274 = vmatpush1.msra.mxu0 0.0
        %275 = vmatprep.subr.mxu0 0.0
        %276 = vmatpush1.msra.mxu0 0.0
        %277 = vmatprep.subr.mxu0 0.0
        %278 = vmatpush1.msra.mxu0 0.0
        %279 = vmatprep.mubr.f32.mxu0 0.0
        %280 = vmatmul.mubr.f32.gmra.mrb[0].mxu0 %v213
        %v281 = vpop.f32.mrb[0].mxu0
        %v282 = vadd.f32 %v210, %v281
        %v283 = vpop.f32.mrb[0].mxu0
        %284 = vdwg.mxu0
        %285 = vadd.xlane.f32.xlu0 %v282
        %v286 = vpop.xlane.xlu0 %285
        %v287 = vrcp.pop 128.0
        %v288 = vmul.f32 %v286, %v287
        %v289 = vsub.f32 %v282, %v288
        %v290 = vmul.f32 %v289, %v289
        %291 = vadd.xlane.f32.xlu0 %v290
        %v292 = vpop.xlane.xlu0 %291
        %v293 = vmul.f32 %v292, %v287
        %v294 = vadd.f32 %v293, 1e-12
        %v295 = vrsqrt.pop %v294
        %v296 = vmul.f32 %v289, %v295
        %v297 = vld [vmem:[%s2 + $0x1] sm:$0x1]
        %v298 = vlaneseq
        %v299 = vshrl.u32 %v298, 7
        %v300 = vsub.s32 0, %v299
        %v301 = vrot.slane %v297, %v300
        %v302 = vmul.f32 %v296, %v301
        %v303 = vld [vmem:[%s2 + $0x2] sm:$0x1]
        %v304 = vlaneseq
        %v305 = vshrl.u32 %v304, 7
        %v306 = vsub.s32 0, %v305
        %v307 = vrot.slane %v303, %v306
        %v308 = vadd.f32 %v302, %v307
        %309 = vst [vmem:[%s200] sm:$0xff] %v308
        %s310 = sand.u32 %s97, 1
        %s311 = scalar_lea.sflag [#allocation4], %s310
        %s312 = sand.u32 %s97, 1
        %s313 = smul.addr %s312, 8
        %s314 = scalar_lea.vmem [#allocation7], %s313
        // Predicated region
        $region41: #{m3_scorer_projection_prepared.1} parent=31 // pred_check
          %p315 = pneg %p107
        $region42: #{m3_scorer_projection_prepared.1} parent=31 // pred_check_branch
          %317 = sbr.rel (%p315) target = $region44
        $region43: #{m3_scorer_projection_prepared.1} parent=31 // pred_region
          %s319 = ssub.s32 128, 128
          %320 = vsyncadd %s311, %s319
          %s321 = smul.addr %s21, 128
          %s322 = scalar_lea.hbm %s3, %s321
          %s324 = sshll.u32 %s314, 4
          %s325 = int_to_ptr.vmem [resolvable:$true] %s324
          %327 = dma.vmem_to_hbm [thread:$0]  %s325, 128, %s322, %s311
        $region44: #{m3_scorer_projection_prepared.1} parent=31 // pred_fallthru
          _
      $region32: #{m3_scorer_projection_prepared.1} parent=5 // pred_fallthru
        _
      %p328 = scmp.le.s32.totalorder 2, %s16
      // Predicated region
      $region45: #{m3_scorer_projection_prepared.1} parent=5 // pred_check
        %p329 = pneg %p328
      $region46: #{m3_scorer_projection_prepared.1} parent=5 // pred_check_branch
        %331 = sbr.rel (%p329) target = $region48
      $region47: #{m3_scorer_projection_prepared.1} parent=5 // pred_region
        %s332 = ssub.s32 %s16, 2
        // Predicated region
        $region49: #{m3_scorer_projection_prepared.1} parent=47 // pred_check
          %p333 = pneg %p113
        $region50: #{m3_scorer_projection_prepared.1} parent=47 // pred_check_branch
          %335 = sbr.rel (%p333) target = $region52
        $region51: #{m3_scorer_projection_prepared.1} parent=47 // pred_region
          %s336 = sand.u32 %s98, 1
          %s337 = scalar_lea.sflag [#allocation4], %s336
          %s338 = sand.u32 %s98, 1
          %s339 = smul.addr %s338, 8
          %s340 = scalar_lea.vmem [#allocation7], %s339
          %341 = dma.done %s337, 128
        $region52: #{m3_scorer_projection_prepared.1} parent=47 // pred_fallthru
          _
      $region48: #{m3_scorer_projection_prepared.1} parent=5 // pred_fallthru
        _
    $region6: #{m3_scorer_projection_prepared.1} parent=1 // loop_footer
      %s20 = sadd.s32 1, %s16
    $region7: #{m3_scorer_projection_prepared.1} parent=1 // loop_footer_branch
      %15 = sbr.rel target = $region3
    $region8: #{m3_scorer_projection_prepared.1} parent=1 // loop_exit
      _
    %342 = vsyncpa [#allocation3], 1
    %s343 = scalar_lea.sflag [#allocation3], 1
    %344 = vsyncpa %s343, 1
    %345 = vsyncpa [#allocation6], 1
    %346 = vsyncpa [#allocation4], 1
    %s347 = scalar_lea.sflag [#allocation4], 1
    %348 = vsyncpa %s347, 1

</llo_original>
